<compile_context>
chip_gen: v7x
topology: tpu7x:2x2x1
jax: 0.10.0
libtpu: 0.0.40
codegen_flags: <defaults>
</compile_context>

<pallas_src>
import functools

import jax
import jax.numpy as jnp
from jax.experimental import pallas as pl
from jax.experimental.pallas import tpu as pltpu


def _rotary_kernel(goff_ref, inv_ref, out_ref, *, k):
    """Writes one (TILE_R, W) block of the folded rotary table.

    goff_ref: (1, W) f32 — position offset of each lane within its k-group
              (goff[c] = c // dim).
    inv_ref:  (1, W) f32 — inv_freq duplicated over both halves and tiled over
              the k groups (inv[c] = inv_freq[c % (dim // 2)]).
    out_ref:  (TILE_R, W) — folded row r holds positions r*k .. r*k + k-1.
    """
    tile_r = out_ref.shape[0]
    row0 = pl.program_id(0) * tile_r  # global folded-row offset of this block
    # Base position of each sublane row (exact in f32 for positions < 2**24).
    r = jax.lax.broadcasted_iota(jnp.int32, (tile_r, 1), 0)
    t0 = ((row0 + r) * k).astype(jnp.float32)
    # (t0 + goff) is the exact integer position; one broadcast add + one
    # broadcast multiply per element, then a single lane-dense unmasked store.
    out_ref[...] = ((t0 + goff_ref[...]) * inv_ref[...]).astype(out_ref.dtype)


def _rotary_table_jnp(seq_len, dim, dtype):
    inv_freq = 1.0 / (10000.0 ** (jnp.arange(0, dim, 2, dtype=jnp.float32) / dim))
    t = jnp.arange(seq_len, dtype=jnp.float32)
    freqs = t[:, None] * inv_freq[None, :]
    return jnp.concatenate([freqs, freqs], axis=-1).astype(dtype)


def rotary_embedding(x, seq_len, dim, max_position_embeddings=2048, *,
                     out_dtype=jnp.float32,
                     target_block_bytes=4 * 1024 * 1024,
                     min_pallas_bytes=64 * 1024,
                     force_pallas=False):
    """Pallas equivalent of RotaryEmbedding.forward(x, seq_len).

    `x` only supplies device/dtype in the PyTorch module; it is accepted for
    API parity but not read. Returns an array of shape (1, seq_len, 1, dim).
    Callers should cache the result per (seq_len, dim) rather than re-running
    the kernel every step.
    """
    del x, max_position_embeddings
    if dim % 2 != 0:
        raise ValueError("RotaryEmbedding requires an even `dim` "
                         "(same assumption as the PyTorch module).")

    itemsize = jnp.dtype(out_dtype).itemsize
    total_bytes = seq_len * dim * itemsize

    # Fast path: for tiny tables the pallas_call launch + pipeline prologue
    # dwarfs the ~KiB of useful work; plain XLA fusion is strictly faster.
    if total_bytes < min_pallas_bytes and not force_pallas:
        return _rotary_table_jnp(seq_len, dim, out_dtype)[None, :, None, :]

    # ---- Lane-dense folding: pack k consecutive positions into one 128-lane
    # row when dim < 128 so every store is full-width (no masked vst.msk) and
    # the writeback DMA moves wide contiguous strips. ----
    if dim < 128 and 128 % dim == 0 and seq_len % (128 // dim) == 0:
        k = 128 // dim
    else:
        k = 1
    w = k * dim              # folded lane width (128 when folded, else dim)
    r_total = seq_len // k   # folded rows

    # ---- Tile size: ~4 MiB blocks (double-buffered ~8 MiB VMEM — safely under
    # v5e's 16 MiB default scoped limit and v7x's 32 MiB default), but keep at
    # least ~4 blocks so v7x's two TensorCores both get work through the
    # "parallel" grid axis. ----
    tile_r = max(8, (target_block_bytes // (w * itemsize)) // 8 * 8)
    cap = -(-r_total // 4)            # cdiv(r_total, 4): >= 4 blocks if possible
    cap = max(8, -(-cap // 8) * 8)    # round up to a sublane multiple
    tile_r = min(tile_r, cap)
    if tile_r >= r_total:
        tile_r = r_total              # single full-extent block (always legal)
    grid = (pl.cdiv(r_total, tile_r),)

    # ---- Lane-pattern rows (tiny; constant block index -> DMA'd once per
    # core, never re-fetched per grid step). ----
    half = dim // 2
    inv_freq = 1.0 / (10000.0 ** (jnp.arange(0, dim, 2, dtype=jnp.float32) / dim))
    inv_row = jnp.tile(inv_freq, 2 * k).reshape(1, w)      # inv_freq[c % half]
    goff_row = jnp.repeat(jnp.arange(k, dtype=jnp.float32), dim).reshape(1, w)

    emb_folded = pl.pallas_call(
        functools.partial(_rotary_kernel, k=k),
        out_shape=jax.ShapeDtypeStruct((r_total, w), out_dtype),
        grid=grid,
        in_specs=[pl.BlockSpec((1, w), lambda i: (0, 0)),
                  pl.BlockSpec((1, w), lambda i: (0, 0))],
        out_specs=pl.BlockSpec((tile_r, w), lambda i: (i, 0)),
        compiler_params=pltpu.CompilerParams(
            dimension_semantics=("parallel",)),
    )(goff_row, inv_row)

    # Row-major unfold back to (seq_len, dim): a free reshape.
    emb = emb_folded.reshape(seq_len, dim)
    # TODO(synk): the biggest end-to-end win is fusing this table generation
    # directly into the RoPE-apply/attention consumer (or at least emitting
    # bf16 via out_dtype) so the seq_len*dim*4-byte HBM round trip disappears.
    return emb[None, :, None, :]


if __name__ == "__main__":
    def reference(seq_len, dim):
        inv_freq = 1.0 / (10000.0 ** (jnp.arange(0, dim, 2, dtype=jnp.float32) / dim))
        t = jnp.arange(seq_len, dtype=jnp.float32)
        freqs = jnp.einsum("i,j->ij", t, inv_freq)
        return jnp.concatenate([freqs, freqs], axis=-1)[None, :, None, :]

    # Small shapes consistent with the module: x is an activation tensor
    # (batch, seq, heads, head_dim); only seq_len/dim matter for the output.
    batch, seq_len, heads, dim = 2, 8, 4, 32
    key = jax.random.PRNGKey(0)
    x = jax.random.normal(key, (batch, seq_len, heads, dim), dtype=jnp.float32)

    # 1) Module-sized shape through the Pallas path (forced — the wrapper would
    #    otherwise take the jnp fast path for a table this tiny).
    out = rotary_embedding(x, seq_len=seq_len, dim=dim, force_pallas=True)
    out = jax.block_until_ready(out)
    ref = reference(seq_len, dim)
    assert out.shape == (1, seq_len, 1, dim), out.shape
    assert out.dtype == jnp.float32, out.dtype
    assert jnp.allclose(out, ref, atol=1e-6, rtol=1e-6)

    # 2) Tiny-table fast path (no pallas_call) produces the same result.
    out_fast = jax.block_until_ready(rotary_embedding(x, seq_len=seq_len, dim=dim))
    assert jnp.allclose(out_fast, ref, atol=1e-6, rtol=1e-6)

    # 3) Slightly larger shapes covering both the lane-folded (dim < 128) and
    #    the natively lane-dense (dim = 128) kernel paths with multi-block grids.
    for s, d in ((512, 64), (256, 128)):
        xs = jax.random.normal(key, (1, s, 1, d), dtype=jnp.float32)
        o = jax.block_until_ready(rotary_embedding(xs, seq_len=s, dim=d))
        assert o.shape == (1, s, 1, d), o.shape
        assert jnp.allclose(o, reference(s, d), atol=1e-6, rtol=1e-6)

    print("KERNEL_OK")
</pallas_src>

<mosaic_0001>
module attributes {stable_mosaic.version = 11 : i64} {
  func.func @_rotary_kernel(%arg0: i32, %arg1: memref<1x128xf32, #tpu.memory_space<vmem>>, %arg2: memref<1x128xf32, #tpu.memory_space<vmem>>, %arg3: memref<2x128xf32, #tpu.memory_space<vmem>>) attributes {dimension_semantics = [#tpu.dimension_semantics<parallel>], iteration_bounds = array<i64: 1>, scalar_prefetch = 0 : i64, scratch_operands = 0 : i64, tpu.core_type = #tpu.core_type<tc>, window_params = [{pipeline_mode = #tpu.pipeline_mode<synchronous>, transform_indices = @transform_0, window_bounds = array<i64: 1, 128>}, {pipeline_mode = #tpu.pipeline_mode<synchronous>, transform_indices = @transform_1, window_bounds = array<i64: 1, 128>}, {transform_indices = @transform_2, window_bounds = array<i64: 2, 128>}]} {
    %c2_i32 = arith.constant 2 : i32
    %0 = arith.muli %arg0, %c2_i32 : i32
    %1 = tpu.iota {dimensions = array<i32: 0>} : vector<2x1xi32>
    %2 = vector.broadcast %0 : i32 to vector<2x1xi32>
    %3 = arith.addi %2, %1 : vector<2x1xi32>
    %c4_i32 = arith.constant 4 : i32
    %4 = vector.broadcast %c4_i32 : i32 to vector<2x1xi32>
    %5 = arith.muli %3, %4 : vector<2x1xi32>
    %6 = arith.sitofp %5 : vector<2x1xi32> to vector<2x1xf32>
    %c0 = arith.constant 0 : index
    %c0_0 = arith.constant 0 : index
    %7 = vector.load %arg1[%c0, %c0_0] : memref<1x128xf32, #tpu.memory_space<vmem>>, vector<1x128xf32>
    %8 = vector.broadcast %6 : vector<2x1xf32> to vector<2x128xf32>
    %9 = vector.broadcast %7 : vector<1x128xf32> to vector<2x128xf32>
    %10 = arith.addf %8, %9 : vector<2x128xf32>
    %c0_1 = arith.constant 0 : index
    %c0_2 = arith.constant 0 : index
    %11 = vector.load %arg2[%c0_1, %c0_2] : memref<1x128xf32, #tpu.memory_space<vmem>>, vector<1x128xf32>
    %12 = vector.broadcast %11 : vector<1x128xf32> to vector<2x128xf32>
    %13 = arith.mulf %10, %12 : vector<2x128xf32>
    %c0_3 = arith.constant 0 : index
    %c0_4 = arith.constant 0 : index
    %14 = vector.load %arg3[%c0_3, %c0_4] : memref<2x128xf32, #tpu.memory_space<vmem>>, vector<2x128xf32>
    tpu.vector_store %arg3[%c0_3, %c0_4], %13 {strides = array<i32>} : memref<2x128xf32, #tpu.memory_space<vmem>>, vector<2x128xf32>,
    return
  }
  func.func @transform_0(%arg0: i32) -> (i32, i32) {
    %c0_i32 = arith.constant 0 : i32
    %c0_i32_0 = arith.constant 0 : i32
    %c0_i32_1 = arith.constant 0 : i32
    return %c0_i32, %c0_i32_0 : i32, i32
  }
  func.func @transform_1(%arg0: i32) -> (i32, i32) {
    %c0_i32 = arith.constant 0 : i32
    %c0_i32_0 = arith.constant 0 : i32
    %c0_i32_1 = arith.constant 0 : i32
    return %c0_i32, %c0_i32_0 : i32, i32
  }
  func.func @transform_2(%arg0: i32) -> (i32, i32) {
    %c0_i32 = arith.constant 0 : i32
    %c0_i32_0 = arith.constant 0 : i32
    return %arg0, %c0_i32 : i32, i32
  }
}

</mosaic_0001>

<llo_original>
// kernel: tpu_custom_call.1
$region0: #{tpu_custom_call.1}
  #allocation0 [shape = 'u32[]', space=smem, size = 0x4, offset = 0x4, fixed_abs, tag = 'smem constant byte address 0x4 - core index']
  #allocation1 [shape = 'u32[144,128]{1,0:T(1,128)}', space=vmem, size = 0x12000, scoped, tag = 'internal scratch']
  %s0 = inlined_call_operand.hbm [shape: f32[1,128], index: 0, kind: input, shape index: {}]
  %s1 = inlined_call_operand.vmem [shape: f32[1,128], index: 1, kind: input, shape index: {}]
  %s2 = inlined_call_operand.hbm [shape: f32[2,128], index: 2, kind: output, shape index: {}]
  %s3 = sld [smem:[#allocation0]]
  $region22: #{tpu_custom_call.1} parent=0
    _
  %s5 = ssub.s32 1, %s3
  %s6 = scalar_select 0, %s5, %s3
  $region1: #{tpu_custom_call.1} parent=0
    #allocation2 [shape = 'u8[512]{0}', space=vmem, size = 0x400, scoped, tag = 'input window, operand 0, single buffered']
    #allocation3 [shape = 's32[1]{0}', space=sflag, size = 0x4, scoped, tag = 'scoped memory for tpu_custom_call.1']
    #allocation4 [shape = 's32[1]{0}', space=sflag, size = 0x4, scoped, tag = 'scoped memory for tpu_custom_call.1']
    #allocation5 [shape = 'u8[1024]{0}', space=vmem, size = 0x400, scoped, tag = 'output window, operand 0, single buffered']
    %7 = vsyncpa [#allocation3], 0
    %8 = vsyncpa [#allocation4], 0
    // Predicated region
    $region2: #{tpu_custom_call.1} parent=1 // pred_check
      _
    $region3: #{tpu_custom_call.1} parent=1 // pred_check_branch
      %10 = sbr.rel (0) target = $region5
    $region4: #{tpu_custom_call.1} parent=1 // pred_region
      %s12 = ssub.s32 16, 16
      %13 = vsyncadd [#allocation3], %s12
      %s15 = sshll.u32 [#allocation2], 4
      %s16 = int_to_ptr.vmem [resolvable:$true] %s15
      %18 = dma.hbm_to_vmem [thread:$0]  %s0, 16, %s16, [#allocation3]
    $region5: #{tpu_custom_call.1} parent=1 // pred_fallthru
      _
    // Predicated region
    $region6: #{tpu_custom_call.1} parent=1 // pred_check
      _
    $region7: #{tpu_custom_call.1} parent=1 // pred_check_branch
      %20 = sbr.rel (0) target = $region9
    $region8: #{tpu_custom_call.1} parent=1 // pred_region
      _
    $region9: #{tpu_custom_call.1} parent=1 // pred_fallthru
      _
    // Predicated region
    $region10: #{tpu_custom_call.1} parent=1 // pred_check
      _
    $region11: #{tpu_custom_call.1} parent=1 // pred_check_branch
      %22 = sbr.rel (0) target = $region13
    $region12: #{tpu_custom_call.1} parent=1 // pred_region
      %23 = dma.done [#allocation3], 16
    $region13: #{tpu_custom_call.1} parent=1 // pred_fallthru
      _
    %s24 = smul.u32 0, 2
    %v25 = vlaneseq
    %v26 = vshrl.u32 %v25, 7
    %v27 = vstv %s24
    %v28 = vadd.s32 %v27, %v26
    %v29 = vmul.u32 %v28, 4
    %v30 = vcvt.s32.f32 %v29
    %v31 = vld [vmem:[#allocation2] sm:$0x1]
    %v33 = vlaneseq
    %v34 = vshrl.u32 %v33, 7
    %v35 = vsub.s32 0, %v34
    %v36 = vrot.slane %v31, %v35
    %v38 = vadd.f32 %v30, %v36
    %v39 = vld [vmem:[%s1] sm:$0x1]
    %v41 = vlaneseq
    %v42 = vshrl.u32 %v41, 7
    %v43 = vsub.s32 0, %v42
    %v44 = vrot.slane %v39, %v43
    %v46 = vmul.f32 %v38, %v44
    %47 = vst [vmem:[#allocation5] sm:$0x3] %v46
    // Predicated region
    $region14: #{tpu_custom_call.1} parent=1 // pred_check
      _
    $region15: #{tpu_custom_call.1} parent=1 // pred_check_branch
      %49 = sbr.rel (0) target = $region17
    $region16: #{tpu_custom_call.1} parent=1 // pred_region
      %s51 = ssub.s32 32, 32
      %52 = vsyncadd [#allocation4], %s51
      %s54 = sshll.u32 [#allocation5], 4
      %s55 = int_to_ptr.vmem [resolvable:$true] %s54
      %57 = dma.vmem_to_hbm [thread:$0]  %s55, 32, %s2, [#allocation4]
    $region17: #{tpu_custom_call.1} parent=1 // pred_fallthru
      _
    // Predicated region
    $region18: #{tpu_custom_call.1} parent=1 // pred_check
      _
    $region19: #{tpu_custom_call.1} parent=1 // pred_check_branch
      %59 = sbr.rel (0) target = $region21
    $region20: #{tpu_custom_call.1} parent=1 // pred_region
      %60 = dma.done [#allocation4], 32
    $region21: #{tpu_custom_call.1} parent=1 // pred_fallthru
      _
    %61 = vsyncpa [#allocation3], 1
    %62 = vsyncpa [#allocation4], 1

</llo_original>
